<compile_context>
chip_gen: v7x
topology: tpu7x:2x2x1
jax: 0.10.0
libtpu: 0.0.40
codegen_flags: <defaults>
</compile_context>

<pallas_src>
import functools

import jax
import jax.numpy as jnp
from jax.experimental import pallas as pl
from jax.experimental.pallas import tpu as pltpu


def _round_up(x, m):
    return ((x + m - 1) // m) * m


def _largest_divisor_tile(total, candidates):
    for c in candidates:
        if total % c == 0:
            return c
    return 128


def _vmem_budget_bytes():
    """Generation-aware VMEM budget (~75% of per-core VMEM, capped at 96 MiB)."""
    try:
        cap = pltpu.get_tpu_info().vmem_capacity_bytes
    except Exception:
        cap = 64 * 1024 * 1024  # conservative: v7x has 64 MiB per TensorCore
    return int(min(cap * 3 // 4, 96 * 1024 * 1024))


def _select_tiles(B, Kp, Np, x_isz, w_isz, o_isz, vmem_budget):
    """Pick (TM, TN, TK): large 256/512-aligned tiles shrunk to fit VMEM."""
    m_align = 16 if x_isz < 4 else 8          # bf16 packs 2 rows per sublane
    TM = min(512, _round_up(B, m_align))
    TN = _largest_divisor_tile(Np, (512, 256, 128))
    TK = _largest_divisor_tile(Kp, (2048, 1024, 512, 256, 128))

    def footprint(tm, tn, tk):
        # double-buffered inputs/outputs + f32 accumulator + bias
        return (2 * tm * tk * x_isz + 2 * tk * tn * w_isz
                + 2 * tn * 4 + 2 * tm * tn * o_isz + tm * tn * 4)

    while footprint(TM, TN, TK) > vmem_budget and TK > 128:
        TK //= 2
    while footprint(TM, TN, TK) > vmem_budget and TN > 128:
        TN //= 2
    while footprint(TM, TN, TK) > vmem_budget and TM > m_align:
        TM = max(m_align, TM // 2)
    return TM, TN, TK


def _matmul_bias_kernel(x_ref, w_ref, b_ref, o_ref, acc_ref):
    """o[i,j] = sum_k x[i,k] @ w[k,j] + b[j]  (pre/post affine folded into x,w,b)."""
    k = pl.program_id(2)

    @pl.when(k == 0)
    def _():
        # Seed the accumulator with the bias -> no extra VPU add in the epilogue.
        acc_ref[...] = jnp.broadcast_to(b_ref[...], acc_ref.shape)

    acc_ref[...] += jnp.dot(x_ref[...], w_ref[...],
                            preferred_element_type=jnp.float32)

    @pl.when(k == pl.num_programs(2) - 1)
    def _():
        o_ref[...] = acc_ref[...].astype(o_ref.dtype)


def _pipeline_forward(x, in_mean_t, in_inv_scale_t, w_p, b_p, *,
                      Din, Dout, Kp, Np, future_seq_len, output_dim,
                      compute_dtype, out_dtype, vmem_budget):
    B = x.shape[0]
    x_isz = jnp.dtype(compute_dtype).itemsize
    w_isz = jnp.dtype(w_p.dtype).itemsize
    o_isz = jnp.dtype(out_dtype).itemsize

    TM, TN, TK = _select_tiles(B, Kp, Np, x_isz, w_isz, o_isz, vmem_budget)
    Bp = _round_up(B, TM)

    # preprocess: standard scaling in f32 (matches reference numerics), then a
    # single cast + zero-pad directly in the compute dtype.
    x_flat = x.reshape(B, Din).astype(jnp.float32)
    xn = ((x_flat - in_mean_t) * in_inv_scale_t).astype(compute_dtype)
    x_p = jnp.pad(xn, ((0, Bp - B), (0, Kp - Din)))

    grid = (Bp // TM, Np // TN, Kp // TK)

    # Advisory cost: account for operand re-streaming across the M/N grid.
    flops = 2 * Bp * Kp * Np
    bytes_accessed = (Bp * Kp * x_isz * (Np // TN)
                      + Kp * Np * w_isz * (Bp // TM)
                      + Np * 4 * (Bp // TM)
                      + Bp * Np * o_isz)

    out_p = pl.pallas_call(
        _matmul_bias_kernel,
        out_shape=jax.ShapeDtypeStruct((Bp, Np), out_dtype),
        grid_spec=pltpu.PrefetchScalarGridSpec(
            num_scalar_prefetch=0,
            grid=grid,
            in_specs=[
                pl.BlockSpec((TM, TK), lambda i, j, k: (i, k)),   # activations
                pl.BlockSpec((TK, TN), lambda i, j, k: (k, j)),   # folded weights
                pl.BlockSpec((1, TN), lambda i, j, k: (0, j)),    # folded bias
            ],
            out_specs=pl.BlockSpec((TM, TN), lambda i, j, k: (i, j)),
            scratch_shapes=[pltpu.VMEM((TM, TN), jnp.float32)],
        ),
        compiler_params=pltpu.CompilerParams(
            dimension_semantics=("parallel", "parallel", "arbitrary"),
            vmem_limit_bytes=int(vmem_budget),
        ),
        cost_estimate=pl.CostEstimate(flops=flops, transcendentals=0,
                                      bytes_accessed=bytes_accessed),
    )(x_p, w_p, b_p)

    out = out_p[:B, :Dout].astype(jnp.float32)
    return out.reshape(B, future_seq_len, output_dim)


class ExportForecastingPipelineTPU:
    """StandardScaler -> flatten+Linear forecaster -> inverse-scale, fused on TPU.

    All parameter work (folding the output affine into (W, b), lane-dense
    padding, weight-dtype cast) happens ONCE here; __call__ only normalizes and
    pads the activations and launches the Pallas kernel (jit-cached per shape).
    """

    def __init__(self, w, b, in_mean, in_scale, out_mean, out_scale, *,
                 past_seq_len, input_dim, future_seq_len, output_dim,
                 compute_dtype=jnp.bfloat16, weight_dtype=None,
                 out_dtype=jnp.float32):
        f32 = jnp.float32
        weight_dtype = compute_dtype if weight_dtype is None else weight_dtype
        # TODO(synk): an fp8 (e4m3) weight stream on v7x would halve W bandwidth
        # on the mem-bound roofline; kept bf16/f32 since the MXU needs matching
        # low-precision x for the mixed-operand path.

        Din = past_seq_len * input_dim
        Dout = future_seq_len * output_dim
        Kp = _round_up(Din, 128)
        Np = _round_up(Dout, 128)
        self._cfg = (Din, Dout, Kp, Np)

        # Only the OUTPUT affine is folded into (W', b'); input normalization
        # stays on the f32 activation path so 1/in_scale never inflates W'
        # dynamic range before a low-precision cast.
        in_mean_t = jnp.tile(in_mean.astype(f32), past_seq_len)              # (Din,)
        in_inv_scale_t = jnp.tile(1.0 / in_scale.astype(f32), past_seq_len)  # (Din,)
        out_scale_t = jnp.tile(out_scale.astype(f32), future_seq_len)        # (Dout,)
        out_mean_t = jnp.tile(out_mean.astype(f32), future_seq_len)          # (Dout,)

        w_eff = w.astype(f32) * out_scale_t[None, :]                         # (Din, Dout)
        b_eff = b.astype(f32) * out_scale_t + out_mean_t                     # (Dout,)

        # Pad once to lane-dense multiples of 128 (unmasked vst / clean MXU N).
        w_p = jnp.zeros((Kp, Np), f32).at[:Din, :Dout].set(w_eff).astype(weight_dtype)
        b_p = jnp.zeros((1, Np), f32).at[0, :Dout].set(b_eff)

        self._params = (jax.device_put(in_mean_t),
                        jax.device_put(in_inv_scale_t),
                        jax.device_put(w_p),
                        jax.device_put(b_p))
        self._forward = jax.jit(functools.partial(
            _pipeline_forward,
            Din=Din, Dout=Dout, Kp=Kp, Np=Np,
            future_seq_len=future_seq_len, output_dim=output_dim,
            compute_dtype=compute_dtype, out_dtype=out_dtype,
            vmem_budget=_vmem_budget_bytes()))

    def __call__(self, x):
        return self._forward(x, *self._params)


def _reference(x, w, b, in_mean, in_scale, out_mean, out_scale,
               past_seq_len, input_dim, future_seq_len, output_dim):
    B = x.shape[0]
    xn = (x - in_mean[None, None, :]) / in_scale[None, None, :]
    y = xn.reshape(B, -1) @ w + b
    y = y.reshape(B, future_seq_len, output_dim)
    return y * out_scale[None, None, :] + out_mean[None, None, :]


if __name__ == "__main__":
    B = 8
    past_seq_len, input_dim = 16, 8      # flattened input dim  = 128
    future_seq_len, output_dim = 4, 2    # flattened output dim = 8 (padded to 128)

    Din = past_seq_len * input_dim
    Dout = future_seq_len * output_dim

    key = jax.random.PRNGKey(0)
    kx, kw, kb, km, ks = jax.random.split(key, 5)

    x = jax.random.normal(kx, (B, past_seq_len, input_dim), dtype=jnp.float32) * 3.0 + 1.5

    # Deterministic synthetic parameters (no checkpoint loading).
    w = jax.random.normal(kw, (Din, Dout), dtype=jnp.float32) * 0.05
    b = jax.random.normal(kb, (Dout,), dtype=jnp.float32) * 0.1
    in_mean = jax.random.normal(km, (input_dim,), dtype=jnp.float32)
    in_scale = jnp.abs(jax.random.normal(ks, (input_dim,), dtype=jnp.float32)) + 0.5
    out_mean = in_mean[:output_dim]
    out_scale = in_scale[:output_dim]

    ref = _reference(x, w, b, in_mean, in_scale, out_mean, out_scale,
                     past_seq_len, input_dim, future_seq_len, output_dim)

    # f32 compute path: exact-path check (tight tolerance).
    pipe_f32 = ExportForecastingPipelineTPU(
        w, b, in_mean, in_scale, out_mean, out_scale,
        past_seq_len=past_seq_len, input_dim=input_dim,
        future_seq_len=future_seq_len, output_dim=output_dim,
        compute_dtype=jnp.float32)
    out_f32 = jax.block_until_ready(pipe_f32(x))
    assert out_f32.shape == (B, future_seq_len, output_dim)
    assert jnp.allclose(out_f32, ref, atol=1e-4, rtol=1e-4), "f32 mismatch vs reference"

    # bf16 activation/weight stream (default fast path): relaxed tolerance.
    pipe_bf16 = ExportForecastingPipelineTPU(
        w, b, in_mean, in_scale, out_mean, out_scale,
        past_seq_len=past_seq_len, input_dim=input_dim,
        future_seq_len=future_seq_len, output_dim=output_dim,
        compute_dtype=jnp.bfloat16)
    out_bf16 = jax.block_until_ready(pipe_bf16(x))
    assert out_bf16.shape == (B, future_seq_len, output_dim)
    assert jnp.allclose(out_bf16, ref, atol=5e-2, rtol=5e-2), "bf16 mismatch vs reference"

    print("KERNEL_OK")
</pallas_src>

<mosaic_0001>
module attributes {stable_mosaic.version = 11 : i64} {
  func.func @_matmul_bias_kernel(%arg0: i32, %arg1: i32, %arg2: i32, %arg3: memref<8x128xf32, #tpu.memory_space<vmem>>, %arg4: memref<128x128xf32, #tpu.memory_space<vmem>>, %arg5: memref<1x128xf32, #tpu.memory_space<vmem>>, %arg6: memref<8x128xf32, #tpu.memory_space<vmem>>, %arg7: memref<8x128xf32, #tpu.memory_space<vmem>>) attributes {dimension_semantics = [#tpu.dimension_semantics<parallel>, #tpu.dimension_semantics<parallel>, #tpu.dimension_semantics<arbitrary>], iteration_bounds = array<i64: 1, 1, 1>, scalar_prefetch = 0 : i64, scratch_operands = 1 : i64, tpu.core_type = #tpu.core_type<tc>, window_params = [{transform_indices = @transform_0, window_bounds = array<i64: 8, 128>}, {transform_indices = @transform_1, window_bounds = array<i64: 128, 128>}, {transform_indices = @transform_2, window_bounds = array<i64: 1, 128>}, {transform_indices = @transform_3, window_bounds = array<i64: 8, 128>}]} {
    %c0_i32 = arith.constant 0 : i32
    %0 = arith.cmpi eq, %arg2, %c0_i32 : i32
    %1 = arith.extui %0 : i1 to i32
    %c0_i32_0 = arith.constant 0 : i32
    %2 = arith.cmpi ne, %1, %c0_i32_0 : i32
    scf.if %2 {
      %c0_10 = arith.constant 0 : index
      %c0_11 = arith.constant 0 : index
      %12 = vector.load %arg5[%c0_10, %c0_11] : memref<1x128xf32, #tpu.memory_space<vmem>>, vector<1x128xf32>
      %13 = vector.shape_cast %12 : vector<1x128xf32> to vector<1x128xf32>
      %14 = vector.broadcast %13 : vector<1x128xf32> to vector<8x128xf32>
      %c0_12 = arith.constant 0 : index
      %c0_13 = arith.constant 0 : index
      %15 = vector.load %arg7[%c0_12, %c0_13] : memref<8x128xf32, #tpu.memory_space<vmem>>, vector<8x128xf32>
      tpu.vector_store %arg7[%c0_12, %c0_13], %14 {strides = array<i32>} : memref<8x128xf32, #tpu.memory_space<vmem>>, vector<8x128xf32>,
    } else {
    }
    %c0 = arith.constant 0 : index
    %c0_1 = arith.constant 0 : index
    %3 = vector.load %arg7[%c0, %c0_1] : memref<8x128xf32, #tpu.memory_space<vmem>>, vector<8x128xf32>
    %c0_2 = arith.constant 0 : index
    %c0_3 = arith.constant 0 : index
    %4 = vector.load %arg3[%c0_2, %c0_3] : memref<8x128xf32, #tpu.memory_space<vmem>>, vector<8x128xf32>
    %c0_4 = arith.constant 0 : index
    %c0_5 = arith.constant 0 : index
    %5 = vector.load %arg4[%c0_4, %c0_5] : memref<128x128xf32, #tpu.memory_space<vmem>>, vector<128x128xf32>
    %cst = arith.constant dense<0.000000e+00> : vector<8x128xf32>
    %6 = tpu.matmul %4, %5, %cst {dimension_numbers = #tpu.dot_dimension_numbers<[1], [0], [0], [1], [0, 0, 1, 1], [], []>} : vector<8x128xf32>, vector<128x128xf32>, vector<8x128xf32> -> vector<8x128xf32>
    %7 = arith.addf %3, %6 : vector<8x128xf32>
    %c0_6 = arith.constant 0 : index
    %c0_7 = arith.constant 0 : index
    %8 = vector.load %arg7[%c0_6, %c0_7] : memref<8x128xf32, #tpu.memory_space<vmem>>, vector<8x128xf32>
    tpu.vector_store %arg7[%c0_6, %c0_7], %7 {strides = array<i32>} : memref<8x128xf32, #tpu.memory_space<vmem>>, vector<8x128xf32>,
    %c0_i32_8 = arith.constant 0 : i32
    %9 = arith.cmpi eq, %arg2, %c0_i32_8 : i32
    %10 = arith.extui %9 : i1 to i32
    %c0_i32_9 = arith.constant 0 : i32
    %11 = arith.cmpi ne, %10, %c0_i32_9 : i32
    scf.if %11 {
      %c0_10 = arith.constant 0 : index
      %c0_11 = arith.constant 0 : index
      %12 = vector.load %arg7[%c0_10, %c0_11] : memref<8x128xf32, #tpu.memory_space<vmem>>, vector<8x128xf32>
      %c0_12 = arith.constant 0 : index
      %c0_13 = arith.constant 0 : index
      %13 = vector.load %arg6[%c0_12, %c0_13] : memref<8x128xf32, #tpu.memory_space<vmem>>, vector<8x128xf32>
      tpu.vector_store %arg6[%c0_12, %c0_13], %12 {strides = array<i32>} : memref<8x128xf32, #tpu.memory_space<vmem>>, vector<8x128xf32>,
    } else {
    }
    return
  }
  func.func @transform_0(%arg0: i32, %arg1: i32, %arg2: i32) -> (i32, i32) {
    %c0_i32 = arith.constant 0 : i32
    return %arg0, %arg2 : i32, i32
  }
  func.func @transform_1(%arg0: i32, %arg1: i32, %arg2: i32) -> (i32, i32) {
    %c0_i32 = arith.constant 0 : i32
    return %arg2, %arg1 : i32, i32
  }
  func.func @transform_2(%arg0: i32, %arg1: i32, %arg2: i32) -> (i32, i32) {
    %c0_i32 = arith.constant 0 : i32
    %c0_i32_0 = arith.constant 0 : i32
    return %c0_i32, %arg1 : i32, i32
  }
  func.func @transform_3(%arg0: i32, %arg1: i32, %arg2: i32) -> (i32, i32) {
    %c0_i32 = arith.constant 0 : i32
    return %arg0, %arg1 : i32, i32
  }
}

</mosaic_0001>

<llo_original>
// kernel: _pipeline_forward.1
$region0: #{_pipeline_forward.1}
  #allocation0 [shape = 'u32[]', space=smem, size = 0x4, offset = 0x4, fixed_abs, tag = 'smem constant byte address 0x4 - core index']
  #allocation1 [shape = 'u32[144,128]{1,0:T(1,128)}', space=vmem, size = 0x12000, scoped, tag = 'internal scratch']
  #allocation2 [shape = 'f32[8,128]{1,0:T(8,128)}', space=vmem, size = 0x1000, scoped, tag = 'scratch operand']
  %s0 = inlined_call_operand.vmem [shape: f32[8,128], index: 0, kind: input, shape index: {}]
  %s1 = inlined_call_operand.vmem [shape: f32[128,128], index: 1, kind: input, shape index: {}]
  %s2 = inlined_call_operand.vmem [shape: f32[1,128], index: 2, kind: input, shape index: {}]
  %s3 = inlined_call_operand.vmem [shape: f32[8,128], index: 3, kind: output, shape index: {}]
  %s4 = sld [smem:[#allocation0]]
  $region30: #{_pipeline_forward.1} parent=0
    _
  %s6 = ssub.s32 1, %s4
  %s7 = scalar_select 0, %s6, %s4
  // Predicated region
  $region2: #{_pipeline_forward.1} parent=0 // pred_check
    _
  $region3: #{_pipeline_forward.1} parent=0 // pred_check_branch
    %9 = sbr.rel (0) target = $region5
  $region4: #{_pipeline_forward.1} parent=0 // pred_region
    _
  $region5: #{_pipeline_forward.1} parent=0 // pred_fallthru
    _
  // Predicated region
  $region6: #{_pipeline_forward.1} parent=0 // pred_check
    _
  $region7: #{_pipeline_forward.1} parent=0 // pred_check_branch
    %11 = sbr.rel (0) target = $region9
  $region8: #{_pipeline_forward.1} parent=0 // pred_region
    _
  $region9: #{_pipeline_forward.1} parent=0 // pred_fallthru
    _
  // Predicated region
  $region10: #{_pipeline_forward.1} parent=0 // pred_check
    _
  $region11: #{_pipeline_forward.1} parent=0 // pred_check_branch
    %13 = sbr.rel (0) target = $region13
  $region12: #{_pipeline_forward.1} parent=0 // pred_region
    _
  $region13: #{_pipeline_forward.1} parent=0 // pred_fallthru
    _
  %p14 = scmp.eq.s32.totalorder 0, 0
  // Predicated region
  $region14: #{_pipeline_forward.1} parent=0 // pred_check
    %p15 = pneg %p14
  $region15: #{_pipeline_forward.1} parent=0 // pred_check_branch
    %17 = sbr.rel (%p15) target = $region17
  $region16: #{_pipeline_forward.1} parent=0 // pred_region
    %v18 = vld [vmem:[%s2] sm:$0x1]
    %v20 = vlaneseq
    %v21 = vshrl.u32 %v20, 7
    %v22 = vsub.s32 0, %v21
    %v23 = vrot.slane %v18, %v22
    %25 = vst [vmem:[#allocation2] sm:$0xff] %v23
  $region17: #{_pipeline_forward.1} parent=0 // pred_fallthru
    _
  %v26 = vld [vmem:[#allocation2] sm:$0xff]
  %v27 = vld [vmem:[%s0] sm:$0xff]
  %v28 = vld [vmem:[%s1] sm:$0xff]
  %v29 = vld [vmem:[%s1 + $0x8] sm:$0xff]
  %v30 = vld [vmem:[%s1 + $0x10] sm:$0xff]
  %v31 = vld [vmem:[%s1 + $0x18] sm:$0xff]
  %v32 = vld [vmem:[%s1 + $0x20] sm:$0xff]
  %v33 = vld [vmem:[%s1 + $0x28] sm:$0xff]
  %v34 = vld [vmem:[%s1 + $0x30] sm:$0xff]
  %v35 = vld [vmem:[%s1 + $0x38] sm:$0xff]
  %v36 = vld [vmem:[%s1 + $0x40] sm:$0xff]
  %v37 = vld [vmem:[%s1 + $0x48] sm:$0xff]
  %v38 = vld [vmem:[%s1 + $0x50] sm:$0xff]
  %v39 = vld [vmem:[%s1 + $0x58] sm:$0xff]
  %v40 = vld [vmem:[%s1 + $0x60] sm:$0xff]
  %v41 = vld [vmem:[%s1 + $0x68] sm:$0xff]
  %v42 = vld [vmem:[%s1 + $0x70] sm:$0xff]
  %v43 = vld [vmem:[%s1 + $0x78] sm:$0xff]
  %44 = vmatprep.subr.mxu0 0.0
  %45 = vmatpush1.msra.mxu0 %v28
  %46 = vmatprep.subr.mxu0 0.0
  %47 = vmatpush1.msra.mxu0 %v29
  %48 = vmatprep.subr.mxu0 0.0
  %49 = vmatpush1.msra.mxu0 %v30
  %50 = vmatprep.subr.mxu0 0.0
  %51 = vmatpush1.msra.mxu0 %v31
  %52 = vmatprep.subr.mxu0 0.0
  %53 = vmatpush1.msra.mxu0 %v32
  %54 = vmatprep.subr.mxu0 0.0
  %55 = vmatpush1.msra.mxu0 %v33
  %56 = vmatprep.subr.mxu0 0.0
  %57 = vmatpush1.msra.mxu0 %v34
  %58 = vmatprep.subr.mxu0 0.0
  %59 = vmatpush1.msra.mxu0 %v35
  %60 = vmatprep.subr.mxu0 0.0
  %61 = vmatpush1.msra.mxu0 %v36
  %62 = vmatprep.subr.mxu0 0.0
  %63 = vmatpush1.msra.mxu0 %v37
  %64 = vmatprep.subr.mxu0 0.0
  %65 = vmatpush1.msra.mxu0 %v38
  %66 = vmatprep.subr.mxu0 0.0
  %67 = vmatpush1.msra.mxu0 %v39
  %68 = vmatprep.subr.mxu0 0.0
  %69 = vmatpush1.msra.mxu0 %v40
  %70 = vmatprep.subr.mxu0 0.0
  %71 = vmatpush1.msra.mxu0 %v41
  %72 = vmatprep.subr.mxu0 0.0
  %73 = vmatpush1.msra.mxu0 %v42
  %74 = vmatprep.subr.mxu0 0.0
  %75 = vmatpush1.msra.mxu0 %v43
  %76 = vmatprep.subr.mxu0 0.0
  %77 = vmatpush1.msra.mxu0 0.0
  %78 = vmatprep.subr.mxu0 0.0
  %79 = vmatpush1.msra.mxu0 0.0
  %80 = vmatprep.subr.mxu0 0.0
  %81 = vmatpush1.msra.mxu0 0.0
  %82 = vmatprep.subr.mxu0 0.0
  %83 = vmatpush1.msra.mxu0 0.0
  %84 = vmatprep.subr.mxu0 0.0
  %85 = vmatpush1.msra.mxu0 0.0
  %86 = vmatprep.subr.mxu0 0.0
  %87 = vmatpush1.msra.mxu0 0.0
  %88 = vmatprep.subr.mxu0 0.0
  %89 = vmatpush1.msra.mxu0 0.0
  %90 = vmatprep.subr.mxu0 0.0
  %91 = vmatpush1.msra.mxu0 0.0
  %92 = vmatprep.subr.mxu0 0.0
  %93 = vmatpush1.msra.mxu0 0.0
  %94 = vmatprep.subr.mxu0 0.0
  %95 = vmatpush1.msra.mxu0 0.0
  %96 = vmatprep.subr.mxu0 0.0
  %97 = vmatpush1.msra.mxu0 0.0
  %98 = vmatprep.subr.mxu0 0.0
  %99 = vmatpush1.msra.mxu0 0.0
  %100 = vmatprep.subr.mxu0 0.0
  %101 = vmatpush1.msra.mxu0 0.0
  %102 = vmatprep.subr.mxu0 0.0
  %103 = vmatpush1.msra.mxu0 0.0
  %104 = vmatprep.subr.mxu0 0.0
  %105 = vmatpush1.msra.mxu0 0.0
  %106 = vmatprep.subr.mxu0 0.0
  %107 = vmatpush1.msra.mxu0 0.0
  %108 = vmatprep.mubr.f32.mxu0 0.0
  %109 = vmatmul.mubr.f32.gmra.mrb[0].mxu0 %v27
  %v110 = vpop.f32.mrb[0].mxu0
  %v111 = vadd.f32 0.0, %v110
  %v112 = vpop.f32.mrb[0].mxu0
  %113 = vdwg.mxu0
  %v114 = vadd.f32 %v26, %v111
  %115 = vst [vmem:[#allocation2] sm:$0xff] %v114
  // Predicated region
  $region18: #{_pipeline_forward.1} parent=0 // pred_check
    %p116 = pneg %p14
  $region19: #{_pipeline_forward.1} parent=0 // pred_check_branch
    %118 = sbr.rel (%p116) target = $region21
  $region20: #{_pipeline_forward.1} parent=0 // pred_region
    %v119 = vld [vmem:[#allocation2] sm:$0xff]
    %120 = vst [vmem:[%s3] sm:$0xff] %v119
  $region21: #{_pipeline_forward.1} parent=0 // pred_fallthru
    _
  // Predicated region
  $region22: #{_pipeline_forward.1} parent=0 // pred_check
    _
  $region23: #{_pipeline_forward.1} parent=0 // pred_check_branch
    %122 = sbr.rel (0) target = $region25
  $region24: #{_pipeline_forward.1} parent=0 // pred_region
    _
  $region25: #{_pipeline_forward.1} parent=0 // pred_fallthru
    _
  // Predicated region
  $region26: #{_pipeline_forward.1} parent=0 // pred_check
    _
  $region27: #{_pipeline_forward.1} parent=0 // pred_check_branch
    %124 = sbr.rel (0) target = $region29
  $region28: #{_pipeline_forward.1} parent=0 // pred_region
    _
  $region29: #{_pipeline_forward.1} parent=0 // pred_fallthru
    _

</llo_original>
